<compile_context>
chip_gen: v6e
topology: v6e:2x2x1
jax: 0.10.0
libtpu: 0.0.40
codegen_flags: <defaults>
</compile_context>

<pallas_src>
import jax
import jax.numpy as jnp
from jax.experimental import pallas as pl
from jax.experimental.pallas import tpu as pltpu

SMOOTH = 1.0
LANES = 128
DESIRED_TILE_ROWS = 2048   # 2048*128*4B = 1 MiB per f32 input block


def _make_dice_kernel(tile_rows, rows_valid, needs_mask):
    """Build the kernel with static tile/row parameters baked in."""

    def kernel(yp_ref, yt_ref, inter_ref, union_ref):
        # Cast inside the kernel (inputs stream from HBM in their own dtype).
        yp = yp_ref[...].astype(jnp.float32)
        yt = yt_ref[...].astype(jnp.float32)

        if needs_mask:
            # Only the last (partial) block has rows past `rows_valid`; the
            # un-DMA'd part of the VMEM buffer is unspecified, so zero it.
            row_ids = pl.program_id(0) * tile_rows + jax.lax.broadcasted_iota(
                jnp.int32, (tile_rows, LANES), 0)
            valid = row_ids < rows_valid
            yp = jnp.where(valid, yp, 0.0)
            yt = jnp.where(valid, yt, 0.0)

        # Lane-preserving partial reduction: fold the tile's sublane groups
        # into an (8,128) partial.  Pure VPU adds, hidden under the DMA;
        # the final cross-lane reduce happens once, outside the kernel, on a
        # tiny array of partials.
        prod = (yt * yp).reshape(tile_rows // 8, 8, LANES)
        ssum = (yt + yp).reshape(tile_rows // 8, 8, LANES)
        inter_ref[...] = jnp.sum(prod, axis=0)
        union_ref[...] = jnp.sum(ssum, axis=0)

    return kernel


def dice_loss(y_pred, y_true):
    assert y_pred.shape == y_true.shape, "y_pred and y_true must have the same shape"

    yp_flat = y_pred.reshape(-1)
    yt_flat = y_true.reshape(-1)
    n = yp_flat.shape[0]

    rows = n // LANES          # full 128-lane rows handled by the kernel
    bulk = rows * LANES
    tail = n - bulk            # < 128 leftover elements handled with plain jnp

    inter = jnp.float32(0.0)
    union = jnp.float32(0.0)

    if rows > 0:
        # Biggest row-tile that is a multiple of 8 and <= desired size.
        tile_rows = max(8, min(DESIRED_TILE_ROWS, (rows // 8) * 8))
        num_tiles = pl.cdiv(rows, tile_rows)
        needs_mask = (num_tiles * tile_rows) != rows

        # Pure reshape of the bulk — no dtype cast, no full-array pad copy.
        yp_2d = yp_flat[:bulk].reshape(rows, LANES)
        yt_2d = yt_flat[:bulk].reshape(rows, LANES)

        kernel = _make_dice_kernel(tile_rows, rows, needs_mask)

        inter_p, union_p = pl.pallas_call(
            kernel,
            out_shape=(
                jax.ShapeDtypeStruct((num_tiles, 8, LANES), jnp.float32),
                jax.ShapeDtypeStruct((num_tiles, 8, LANES), jnp.float32),
            ),
            grid_spec=pltpu.PrefetchScalarGridSpec(
                num_scalar_prefetch=0,
                grid=(num_tiles,),
                in_specs=[
                    pl.BlockSpec((tile_rows, LANES), lambda i: (i, 0)),
                    pl.BlockSpec((tile_rows, LANES), lambda i: (i, 0)),
                ],
                out_specs=[
                    pl.BlockSpec((None, 8, LANES), lambda i: (i, 0, 0)),
                    pl.BlockSpec((None, 8, LANES), lambda i: (i, 0, 0)),
                ],
            ),
            compiler_params=pltpu.CompilerParams(
                # Independent per-tile partials: shardable across TCs on v7x.
                dimension_semantics=("parallel",),
            ),
        )(yp_2d, yt_2d)

        inter = inter + jnp.sum(inter_p)
        union = union + jnp.sum(union_p)

    if tail > 0:
        yp_t = yp_flat[bulk:].astype(jnp.float32)
        yt_t = yt_flat[bulk:].astype(jnp.float32)
        inter = inter + jnp.sum(yt_t * yp_t)
        union = union + jnp.sum(yt_t + yp_t)

    dice_score = (2.0 * inter + SMOOTH) / (union + SMOOTH)
    return 1.0 - dice_score


def dice_loss_ref(y_pred, y_true):
    yp = jnp.ravel(y_pred).astype(jnp.float32)
    yt = jnp.ravel(y_true).astype(jnp.float32)
    inter = jnp.sum(yt * yp)
    union = jnp.sum(yt + yp)
    return 1.0 - (2.0 * inter + SMOOTH) / (union + SMOOTH)


if __name__ == "__main__":
    key = jax.random.PRNGKey(0)
    k1, k2 = jax.random.split(key)

    # NCHW, batch=2, channels=4, spatial=16x16 (typical segmentation head)
    y_pred = jax.nn.sigmoid(jax.random.normal(k1, (2, 4, 16, 16), dtype=jnp.float32))
    y_true = (jax.random.uniform(k2, (2, 4, 16, 16)) > 0.5).astype(jnp.float32)

    loss = jax.block_until_ready(dice_loss(y_pred, y_true))
    ref = jax.block_until_ready(dice_loss_ref(y_pred, y_true))

    assert jnp.allclose(loss, ref, atol=1e-5, rtol=1e-5), (loss, ref)
    print("KERNEL_OK")
</pallas_src>

<mosaic_0001>
module attributes {stable_mosaic.version = 11 : i64} {
  func.func @kernel(%arg0: i32, %arg1: memref<16x128xf32, #tpu.memory_space<vmem>>, %arg2: memref<16x128xf32, #tpu.memory_space<vmem>>, %arg3: memref<1x8x128xf32, #tpu.memory_space<vmem>>, %arg4: memref<1x8x128xf32, #tpu.memory_space<vmem>>) attributes {dimension_semantics = [#tpu.dimension_semantics<parallel>], iteration_bounds = array<i64: 1>, scalar_prefetch = 0 : i64, scratch_operands = 0 : i64, tpu.core_type = #tpu.core_type<tc>, window_params = [{transform_indices = @transform_0, window_bounds = array<i64: 16, 128>}, {transform_indices = @transform_1, window_bounds = array<i64: 16, 128>}, {transform_indices = @transform_2, window_bounds = array<i64: 1, 8, 128>}, {transform_indices = @transform_3, window_bounds = array<i64: 1, 8, 128>}]} {
    %c0 = arith.constant 0 : index
    %c0_0 = arith.constant 0 : index
    %0 = vector.load %arg1[%c0, %c0_0] : memref<16x128xf32, #tpu.memory_space<vmem>>, vector<16x128xf32>
    %c0_1 = arith.constant 0 : index
    %c0_2 = arith.constant 0 : index
    %1 = vector.load %arg2[%c0_1, %c0_2] : memref<16x128xf32, #tpu.memory_space<vmem>>, vector<16x128xf32>
    %2 = arith.mulf %1, %0 : vector<16x128xf32>
    %3 = vector.shape_cast %2 : vector<16x128xf32> to vector<2x8x128xf32>
    %4 = arith.addf %1, %0 : vector<16x128xf32>
    %5 = vector.shape_cast %4 : vector<16x128xf32> to vector<2x8x128xf32>
    %cst = arith.constant dense<0.000000e+00> : vector<8x128xf32>
    %6 = vector.multi_reduction <add>, %3, %cst [0] : vector<2x8x128xf32> to vector<8x128xf32>
    %c0_3 = arith.constant 0 : index
    %c0_4 = arith.constant 0 : index
    %c0_5 = arith.constant 0 : index
    %7 = vector.load %arg3[%c0_3, %c0_4, %c0_5] : memref<1x8x128xf32, #tpu.memory_space<vmem>>, vector<1x8x128xf32>
    %8 = vector.shape_cast %7 : vector<1x8x128xf32> to vector<8x128xf32>
    %9 = vector.shape_cast %6 : vector<8x128xf32> to vector<1x8x128xf32>
    tpu.vector_store %arg3[%c0_3, %c0_4, %c0_5], %9 {strides = array<i32>} : memref<1x8x128xf32, #tpu.memory_space<vmem>>, vector<1x8x128xf32>,
    %cst_6 = arith.constant dense<0.000000e+00> : vector<8x128xf32>
    %10 = vector.multi_reduction <add>, %5, %cst_6 [0] : vector<2x8x128xf32> to vector<8x128xf32>
    %c0_7 = arith.constant 0 : index
    %c0_8 = arith.constant 0 : index
    %c0_9 = arith.constant 0 : index
    %11 = vector.load %arg4[%c0_7, %c0_8, %c0_9] : memref<1x8x128xf32, #tpu.memory_space<vmem>>, vector<1x8x128xf32>
    %12 = vector.shape_cast %11 : vector<1x8x128xf32> to vector<8x128xf32>
    %13 = vector.shape_cast %10 : vector<8x128xf32> to vector<1x8x128xf32>
    tpu.vector_store %arg4[%c0_7, %c0_8, %c0_9], %13 {strides = array<i32>} : memref<1x8x128xf32, #tpu.memory_space<vmem>>, vector<1x8x128xf32>,
    return
  }
  func.func @transform_0(%arg0: i32) -> (i32, i32) {
    %c0_i32 = arith.constant 0 : i32
    %c0_i32_0 = arith.constant 0 : i32
    return %arg0, %c0_i32 : i32, i32
  }
  func.func @transform_1(%arg0: i32) -> (i32, i32) {
    %c0_i32 = arith.constant 0 : i32
    %c0_i32_0 = arith.constant 0 : i32
    return %arg0, %c0_i32 : i32, i32
  }
  func.func @transform_2(%arg0: i32) -> (i32, i32, i32) {
    %c0_i32 = arith.constant 0 : i32
    %c0_i32_0 = arith.constant 0 : i32
    %c0_i32_1 = arith.constant 0 : i32
    return %arg0, %c0_i32, %c0_i32_0 : i32, i32, i32
  }
  func.func @transform_3(%arg0: i32) -> (i32, i32, i32) {
    %c0_i32 = arith.constant 0 : i32
    %c0_i32_0 = arith.constant 0 : i32
    %c0_i32_1 = arith.constant 0 : i32
    return %arg0, %c0_i32, %c0_i32_0 : i32, i32, i32
  }
}

</mosaic_0001>

<llo_original>
// kernel: tpu_custom_call.1
$region0: #{tpu_custom_call.1}
  #allocation0 [shape = 'u32[]', space=smem, size = 0x4, offset = 0x4, fixed_abs, tag = 'smem constant byte address 0x4 - core index']
  #allocation1 [shape = 'u32[144,128]{1,0:T(1,128)}', space=vmem, size = 0x12000, scoped, tag = 'internal scratch']
  %s0 = inlined_call_operand.hbm [shape: f32[16,128], index: 0, kind: input, shape index: {}]
  %s1 = inlined_call_operand.hbm [shape: f32[16,128], index: 1, kind: input, shape index: {}]
  %s2 = inlined_call_operand.hbm [shape: f32[1,8,128], index: 2, kind: output, shape index: {0}]
  %s3 = inlined_call_operand.hbm [shape: f32[1,8,128], index: 3, kind: output, shape index: {1}]
  %4 = xla_tuple %s2, %s3
  %s5 = sld [smem:[#allocation0]]
  $region34: #{tpu_custom_call.1} parent=0
    _
  %s7 = ssub.s32 1, %s5
  %s8 = scalar_select 0, %s7, %s5
  $region1: #{tpu_custom_call.1} parent=0
    #allocation2 [shape = 'u8[8192]{0}', space=vmem, size = 0x2000, scoped, tag = 'input window, operand 0, single buffered']
    #allocation3 [shape = 's32[1]{0}', space=sflag, size = 0x4, scoped, tag = 'scoped memory for tpu_custom_call.1']
    #allocation4 [shape = 's32[1]{0}', space=sflag, size = 0x4, scoped, tag = 'scoped memory for tpu_custom_call.1']
    #allocation5 [shape = 'u8[8192]{0}', space=vmem, size = 0x2000, scoped, tag = 'input window, operand 1, single buffered']
    #allocation6 [shape = 's32[1]{0}', space=sflag, size = 0x4, scoped, tag = 'scoped memory for tpu_custom_call.1']
    #allocation7 [shape = 'u8[4096]{0}', space=vmem, size = 0x1000, scoped, tag = 'output window, operand 0, single buffered']
    #allocation8 [shape = 'u8[4096]{0}', space=vmem, size = 0x1000, scoped, tag = 'output window, operand 1, single buffered']
    #allocation9 [shape = 's32[1]{0}', space=sflag, size = 0x4, scoped, tag = 'scoped memory for tpu_custom_call.1']
    %9 = vsyncpa [#allocation3], 0
    %10 = vsyncpa [#allocation6], 0
    %11 = vsyncpa [#allocation4], 0
    %12 = vsyncpa [#allocation9], 0
    // Predicated region
    $region2: #{tpu_custom_call.1} parent=1 // pred_check
      _
    $region3: #{tpu_custom_call.1} parent=1 // pred_check_branch
      %14 = sbr.rel (0) target = $region5
    $region4: #{tpu_custom_call.1} parent=1 // pred_region
      %s16 = ssub.s32 256, 256
      %17 = vsyncadd [#allocation3], %s16
      %s18 = sshll.u32 [#allocation2], 4
      %s19 = int_to_ptr.vmem [resolvable:$true] %s18
      %24 = dma.hbm_to_vmem [thread:$0]  %s0, 256, %s19, [#allocation3], 128, 128, 8
    $region5: #{tpu_custom_call.1} parent=1 // pred_fallthru
      _
    // Predicated region
    $region6: #{tpu_custom_call.1} parent=1 // pred_check
      _
    $region7: #{tpu_custom_call.1} parent=1 // pred_check_branch
      %26 = sbr.rel (0) target = $region9
    $region8: #{tpu_custom_call.1} parent=1 // pred_region
      %s28 = ssub.s32 256, 256
      %29 = vsyncadd [#allocation6], %s28
      %s30 = sshll.u32 [#allocation5], 4
      %s31 = int_to_ptr.vmem [resolvable:$true] %s30
      %36 = dma.hbm_to_vmem [thread:$0]  %s1, 256, %s31, [#allocation6], 128, 128, 8
    $region9: #{tpu_custom_call.1} parent=1 // pred_fallthru
      _
    // Predicated region
    $region10: #{tpu_custom_call.1} parent=1 // pred_check
      _
    $region11: #{tpu_custom_call.1} parent=1 // pred_check_branch
      %38 = sbr.rel (0) target = $region13
    $region12: #{tpu_custom_call.1} parent=1 // pred_region
      %39 = dma.done [#allocation3], 256
    $region13: #{tpu_custom_call.1} parent=1 // pred_fallthru
      _
    // Predicated region
    $region14: #{tpu_custom_call.1} parent=1 // pred_check
      _
    $region15: #{tpu_custom_call.1} parent=1 // pred_check_branch
      %41 = sbr.rel (0) target = $region17
    $region16: #{tpu_custom_call.1} parent=1 // pred_region
      %42 = dma.done [#allocation6], 256
    $region17: #{tpu_custom_call.1} parent=1 // pred_fallthru
      _
    %v43 = vld [vmem:[#allocation2] sm:$0xff]
    %v44 = vld [vmem:[#allocation2 + $0x8] sm:$0xff]
    %v45 = vld [vmem:[#allocation5] sm:$0xff]
    %v46 = vld [vmem:[#allocation5 + $0x8] sm:$0xff]
    %v47 = vmul.f32 %v45, %v43
    %v48 = vmul.f32 %v46, %v44
    %v49 = vadd.f32 %v45, %v43
    %v50 = vadd.f32 %v46, %v44
    %v51 = vadd.f32 %v47, %v48
    %52 = vst [vmem:[#allocation7] sm:$0xff] %v51
    %v53 = vadd.f32 %v49, %v50
    %54 = vst [vmem:[#allocation8] sm:$0xff] %v53
    // Predicated region
    $region18: #{tpu_custom_call.1} parent=1 // pred_check
      _
    $region19: #{tpu_custom_call.1} parent=1 // pred_check_branch
      %56 = sbr.rel (0) target = $region21
    $region20: #{tpu_custom_call.1} parent=1 // pred_region
      %s58 = ssub.s32 128, 128
      %59 = vsyncadd [#allocation4], %s58
      %s61 = sshll.u32 [#allocation7], 4
      %s62 = int_to_ptr.vmem [resolvable:$true] %s61
      %64 = dma.vmem_to_hbm [thread:$0]  %s62, 128, %s2, [#allocation4]
    $region21: #{tpu_custom_call.1} parent=1 // pred_fallthru
      _
    // Predicated region
    $region22: #{tpu_custom_call.1} parent=1 // pred_check
      _
    $region23: #{tpu_custom_call.1} parent=1 // pred_check_branch
      %66 = sbr.rel (0) target = $region25
    $region24: #{tpu_custom_call.1} parent=1 // pred_region
      %s68 = ssub.s32 128, 128
      %69 = vsyncadd [#allocation9], %s68
      %s71 = sshll.u32 [#allocation8], 4
      %s72 = int_to_ptr.vmem [resolvable:$true] %s71
      %74 = dma.vmem_to_hbm [thread:$0]  %s72, 128, %s3, [#allocation9]
    $region25: #{tpu_custom_call.1} parent=1 // pred_fallthru
      _
    // Predicated region
    $region26: #{tpu_custom_call.1} parent=1 // pred_check
      _
    $region27: #{tpu_custom_call.1} parent=1 // pred_check_branch
      %76 = sbr.rel (0) target = $region29
    $region28: #{tpu_custom_call.1} parent=1 // pred_region
      %77 = dma.done [#allocation4], 128
    $region29: #{tpu_custom_call.1} parent=1 // pred_fallthru
      _
    // Predicated region
    $region30: #{tpu_custom_call.1} parent=1 // pred_check
      _
    $region31: #{tpu_custom_call.1} parent=1 // pred_check_branch
      %79 = sbr.rel (0) target = $region33
    $region32: #{tpu_custom_call.1} parent=1 // pred_region
      %80 = dma.done [#allocation9], 128
    $region33: #{tpu_custom_call.1} parent=1 // pred_fallthru
      _
    %81 = vsyncpa [#allocation3], 1
    %82 = vsyncpa [#allocation6], 1
    %83 = vsyncpa [#allocation4], 1
    %84 = vsyncpa [#allocation9], 1

</llo_original>
